<compile_context>
chip_gen: v6e
topology: v6e:2x2x1
jax: 0.10.0
libtpu: 0.0.40
codegen_flags: <defaults>
</compile_context>

<pallas_src>
import functools

import jax
import jax.numpy as jnp
from jax.experimental import pallas as pl
from jax.experimental.pallas import tpu as pltpu

LEAKY_SLOPE = 0.01  # PyTorch nn.LeakyReLU default negative_slope


def _se_kernel(x_ref, wc_ref, bc_ref, w1_ref, w2_ref, o_ref, *, inv_pp, b_blk):
    # x_ref : (B_BLK, Cin, Pp)   zero-padded input, padded spatial on lanes
    # wc_ref: (Cout, Cin)        1x1 conv weight
    # bc_ref: (Cout, 1)          conv bias (column)
    # w1_ref: (Cout, Hd)         fc1 applied as y @ w1
    # w2_ref: (Cout, Hd)         fc2 applied as z @ w2.T
    # o_ref : (B_BLK, Cout, Pp)  lane-dense padded output slab
    wc = wc_ref[...]                       # (Cout, Cin) - VMEM-resident
    bias = bc_ref[...]                     # (Cout, 1)
    w1 = w1_ref[...]                       # (Cout, Hd)
    w2 = w2_ref[...]                       # (Cout, Hd)

    for b in range(b_blk):                 # static unroll over the batch block
        # 1x1 conv over the zero-padded, lane-flattened spatial axis: one
        # lane-dense rank-2 MXU matmul (N = Hp*Wp).  Border columns come out
        # as `bias` automatically (conv of zeros), matching padding=1.
        h = jnp.dot(wc, x_ref[b], preferred_element_type=jnp.float32)  # (Cout, Pp)
        h = h + bias
        h = jnp.maximum(h, LEAKY_SLOPE * h)            # LeakyReLU (VPU)

        # Global average pool over the padded map (single lane reduce).
        pooled = jnp.sum(h, axis=1, keepdims=True) * inv_pp           # (Cout, 1)

        # SE MLP on the VPU (M=1 matmuls are not worth MXU pushes):
        #   z = relu(y @ w1) ; s = sigmoid(z @ w2.T)
        z = jnp.maximum(jnp.sum(pooled * w1, axis=0, keepdims=True), 0.0)  # (1, Hd)
        s = jax.nn.sigmoid(jnp.sum(z * w2, axis=1, keepdims=True))         # (Cout, 1)

        # Single composed, contiguous, lane-dense store per batch element
        # (no border pre-write, no per-row masked stores).
        o_ref[b] = h * s


def _tpu_topology():
    """Best-effort (tensorcores_per_chip, per_core_vmem_bytes); conservative fallbacks."""
    cores, vmem = 1, 64 * 2**20            # assume 1 TC and v7x-sized VMEM
    try:
        info = pltpu.get_tpu_info()
        v = getattr(info, "vmem_capacity_bytes", None)
        if isinstance(v, int) and v > 0:
            vmem = v
        for name in ("num_cores", "core_count", "tensor_core_count"):
            c = getattr(info, name, None)
            if isinstance(c, int) and c > 0:
                cores = c
                break
    except Exception:
        pass                               # interpret mode / AOT: keep defaults
    return cores, vmem


def se_layer(x_nchw, wc, bc, w1, w2):
    """x_nchw: (B, Cin, H, W) f32.  wc: (Cout, Cin).  bc: (Cout,).
       w1: (Cout, Hd) (fc1 as y @ w1).  w2: (channel, Hd) (fc2 as z @ w2.T).
       Returns (B, Cout, H+2, W+2) f32 NCHW, matching the PyTorch module."""
    B, Cin, H, W = x_nchw.shape
    Cout, Cin_w = wc.shape
    Hd = w1.shape[1]
    assert Cin_w == Cin, "conv weight / input channel mismatch"
    assert w1.shape[0] == Cout and w2.shape[1] == Hd
    # The PyTorch module's .view(b, c, 1, 1) only works when channel == r_channel.
    assert w2.shape[0] == Cout, "SELayer requires channel == r_channel"

    Hp, Wp = H + 2, W + 2
    Pp = Hp * Wp

    # Conv padding=1 applied once in the wrapper (XLA fuses pad+reshape into a
    # single pass); the kernel then sees a lane-dense padded spatial axis.
    x_pad = jnp.pad(x_nchw, ((0, 0), (0, 0), (1, 1), (1, 1)))
    x_flat = x_pad.reshape(B, Cin, Pp)
    bc_col = bc.reshape(Cout, 1)

    # Generation-aware batch folding: one grid step per TensorCore
    # (grid=(1,) on v5e/v6e single-TC chips; 2 "parallel" steps on v7x).
    n_tc, vmem_cap = _tpu_topology()
    n_steps = min(B, max(1, n_tc))
    while B % n_steps != 0:
        n_steps -= 1
    B_BLK = B // n_steps

    # VMEM budget from actual block sizes (double-buffered) + weights, with
    # headroom, capped well below the smallest per-TC VMEM (64 MiB on v7x).
    itemsize = 4
    in_block = B_BLK * Cin * Pp * itemsize
    out_block = B_BLK * Cout * Pp * itemsize
    weight_bytes = (Cout * Cin + Cout + 2 * Cout * Hd) * itemsize
    vmem_need = 2 * (in_block + out_block) + weight_bytes
    vmem_limit = int(min(max(16 * 2**20, 2 * vmem_need), (3 * vmem_cap) // 4))

    kernel = functools.partial(_se_kernel, inv_pp=1.0 / Pp, b_blk=B_BLK)

    out_flat = pl.pallas_call(
        kernel,
        out_shape=jax.ShapeDtypeStruct((B, Cout, Pp), jnp.float32),
        grid_spec=pltpu.PrefetchScalarGridSpec(
            num_scalar_prefetch=0,
            grid=(n_steps,),
            in_specs=[
                pl.BlockSpec((B_BLK, Cin, Pp), lambda i: (i, 0, 0)),
                pl.BlockSpec((Cout, Cin), lambda i: (0, 0)),   # weights: constant
                pl.BlockSpec((Cout, 1), lambda i: (0, 0)),     # index maps ->
                pl.BlockSpec((Cout, Hd), lambda i: (0, 0)),    # VMEM-resident
                pl.BlockSpec((Cout, Hd), lambda i: (0, 0)),
            ],
            out_specs=pl.BlockSpec((B_BLK, Cout, Pp), lambda i: (i, 0, 0)),
        ),
        compiler_params=pltpu.CompilerParams(
            dimension_semantics=("parallel",),
            vmem_limit_bytes=vmem_limit),
    )(x_flat, wc, bc_col, w1, w2)

    # Free contiguous reshape back to the module's padded NCHW output.
    return out_flat.reshape(B, Cout, Hp, Wp)


def _reference(x_nchw, wc, bc, w1, w2):
    # pure-JAX reference for the correctness check
    x_nhwc = jnp.transpose(x_nchw, (0, 2, 3, 1))
    x_p = jnp.pad(x_nhwc, ((0, 0), (1, 1), (1, 1), (0, 0)))
    h = jnp.einsum("bhwc,oc->bhwo", x_p, wc) + bc
    h = jnp.where(h >= 0, h, LEAKY_SLOPE * h)
    y = jnp.mean(h, axis=(1, 2))                       # (B, Cout)
    z = jnp.maximum(y @ w1, 0.0)                       # (B, Hd)
    s = jax.nn.sigmoid(z @ w2.T)                       # (B, Cout)
    out = h * s[:, None, None, :]
    return jnp.transpose(out, (0, 3, 1, 2))


if __name__ == "__main__":
    # small, module-consistent shapes: channel == r_channel (required by the
    # PyTorch forward's .view), reduction divides r_channel.
    B, channel, H, W = 2, 16, 8, 8
    r_channel, reduction = 16, 4
    hidden = r_channel // reduction

    key = jax.random.PRNGKey(0)
    kx, kw, kb, k1, k2 = jax.random.split(key, 5)

    x = jax.random.normal(kx, (B, channel, H, W), dtype=jnp.float32)
    # conv weight stored as (Cout, Cin) for the channel-contracting matmul
    wc = jax.random.normal(kw, (r_channel, channel), dtype=jnp.float32) * 0.1
    bc = jax.random.normal(kb, (r_channel,), dtype=jnp.float32) * 0.1
    w1 = jax.random.normal(k1, (r_channel, hidden), dtype=jnp.float32) * 0.1
    w2 = jax.random.normal(k2, (channel, hidden), dtype=jnp.float32) * 0.1

    out = se_layer(x, wc, bc, w1, w2)
    jax.block_until_ready(out)

    ref = _reference(x, wc, bc, w1, w2)
    assert out.shape == (B, r_channel, H + 2, W + 2)
    assert jnp.allclose(out, ref, atol=1e-4, rtol=1e-4)

    print("KERNEL_OK")
</pallas_src>

<mosaic_0001>
module attributes {stable_mosaic.version = 11 : i64} {
  func.func @_se_kernel(%arg0: i32, %arg1: memref<2x16x100xf32, #tpu.memory_space<vmem>>, %arg2: memref<16x16xf32, #tpu.memory_space<vmem>>, %arg3: memref<16x1xf32, #tpu.memory_space<vmem>>, %arg4: memref<16x4xf32, #tpu.memory_space<vmem>>, %arg5: memref<16x4xf32, #tpu.memory_space<vmem>>, %arg6: memref<2x16x100xf32, #tpu.memory_space<vmem>>) attributes {dimension_semantics = [#tpu.dimension_semantics<parallel>], iteration_bounds = array<i64: 1>, scalar_prefetch = 0 : i64, scratch_operands = 0 : i64, tpu.core_type = #tpu.core_type<tc>, window_params = [{transform_indices = @transform_0, window_bounds = array<i64: 2, 16, 100>}, {pipeline_mode = #tpu.pipeline_mode<synchronous>, transform_indices = @transform_1, window_bounds = array<i64: 16, 16>}, {pipeline_mode = #tpu.pipeline_mode<synchronous>, transform_indices = @transform_2, window_bounds = array<i64: 16, 1>}, {pipeline_mode = #tpu.pipeline_mode<synchronous>, transform_indices = @transform_3, window_bounds = array<i64: 16, 4>}, {pipeline_mode = #tpu.pipeline_mode<synchronous>, transform_indices = @transform_4, window_bounds = array<i64: 16, 4>}, {transform_indices = @transform_5, window_bounds = array<i64: 2, 16, 100>}]} {
    %c0 = arith.constant 0 : index
    %c0_0 = arith.constant 0 : index
    %0 = vector.load %arg2[%c0, %c0_0] : memref<16x16xf32, #tpu.memory_space<vmem>>, vector<16x16xf32>
    %c0_1 = arith.constant 0 : index
    %c0_2 = arith.constant 0 : index
    %1 = vector.load %arg3[%c0_1, %c0_2] : memref<16x1xf32, #tpu.memory_space<vmem>>, vector<16x1xf32>
    %c0_3 = arith.constant 0 : index
    %c0_4 = arith.constant 0 : index
    %2 = vector.load %arg4[%c0_3, %c0_4] : memref<16x4xf32, #tpu.memory_space<vmem>>, vector<16x4xf32>
    %c0_5 = arith.constant 0 : index
    %c0_6 = arith.constant 0 : index
    %3 = vector.load %arg5[%c0_5, %c0_6] : memref<16x4xf32, #tpu.memory_space<vmem>>, vector<16x4xf32>
    %c0_7 = arith.constant 0 : index
    %c0_8 = arith.constant 0 : index
    %c0_9 = arith.constant 0 : index
    %4 = vector.load %arg1[%c0_7, %c0_8, %c0_9] : memref<2x16x100xf32, #tpu.memory_space<vmem>>, vector<1x16x100xf32>
    %5 = vector.shape_cast %4 : vector<1x16x100xf32> to vector<16x100xf32>
    %cst = arith.constant dense<0.000000e+00> : vector<16x100xf32>
    %6 = tpu.matmul %0, %5, %cst {dimension_numbers = #tpu.dot_dimension_numbers<[1], [0], [0], [1], [0, 0, 1, 1], [], []>} : vector<16x16xf32>, vector<16x100xf32>, vector<16x100xf32> -> vector<16x100xf32>
    %7 = vector.broadcast %1 : vector<16x1xf32> to vector<16x100xf32>
    %8 = arith.addf %6, %7 : vector<16x100xf32>
    %cst_10 = arith.constant 0.00999999977 : f32
    %9 = vector.broadcast %cst_10 : f32 to vector<16x100xf32>
    %10 = arith.mulf %9, %8 : vector<16x100xf32>
    %11 = arith.maximumf %8, %10 : vector<16x100xf32>
    %cst_11 = arith.constant dense<0.000000e+00> : vector<16xf32>
    %12 = vector.multi_reduction <add>, %11, %cst_11 [1] : vector<16x100xf32> to vector<16xf32>
    %13 = vector.shape_cast %12 : vector<16xf32> to vector<16x1xf32>
    %cst_12 = arith.constant 0.00999999977 : f32
    %14 = vector.broadcast %cst_12 : f32 to vector<16x1xf32>
    %15 = arith.mulf %13, %14 : vector<16x1xf32>
    %16 = vector.broadcast %15 : vector<16x1xf32> to vector<16x4xf32>
    %17 = arith.mulf %16, %2 : vector<16x4xf32>
    %cst_13 = arith.constant dense<0.000000e+00> : vector<4xf32>
    %18 = vector.multi_reduction <add>, %17, %cst_13 [0] : vector<16x4xf32> to vector<4xf32>
    %19 = vector.shape_cast %18 : vector<4xf32> to vector<1x4xf32>
    %cst_14 = arith.constant 0.000000e+00 : f32
    %20 = vector.broadcast %cst_14 : f32 to vector<1x4xf32>
    %21 = arith.maximumf %19, %20 : vector<1x4xf32>
    %22 = vector.broadcast %21 : vector<1x4xf32> to vector<16x4xf32>
    %23 = arith.mulf %22, %3 : vector<16x4xf32>
    %cst_15 = arith.constant dense<0.000000e+00> : vector<16xf32>
    %24 = vector.multi_reduction <add>, %23, %cst_15 [1] : vector<16x4xf32> to vector<16xf32>
    %25 = vector.shape_cast %24 : vector<16xf32> to vector<16x1xf32>
    %26 = arith.negf %25 : vector<16x1xf32>
    %27 = math.exp %26 : vector<16x1xf32>
    %cst_16 = arith.constant 1.000000e+00 : f32
    %28 = vector.broadcast %cst_16 : f32 to vector<16x1xf32>
    %29 = arith.addf %28, %27 : vector<16x1xf32>
    %30 = arith.divf %28, %29 : vector<16x1xf32>
    %31 = vector.broadcast %30 : vector<16x1xf32> to vector<16x100xf32>
    %32 = arith.mulf %11, %31 : vector<16x100xf32>
    %c0_17 = arith.constant 0 : index
    %c0_18 = arith.constant 0 : index
    %c0_19 = arith.constant 0 : index
    %33 = vector.load %arg6[%c0_17, %c0_18, %c0_19] : memref<2x16x100xf32, #tpu.memory_space<vmem>>, vector<1x16x100xf32>
    %34 = vector.shape_cast %33 : vector<1x16x100xf32> to vector<16x100xf32>
    %35 = vector.shape_cast %32 : vector<16x100xf32> to vector<1x16x100xf32>
    tpu.vector_store %arg6[%c0_17, %c0_18, %c0_19], %35 {strides = array<i32>} : memref<2x16x100xf32, #tpu.memory_space<vmem>>, vector<1x16x100xf32>,
    %c1 = arith.constant 1 : index
    %c0_20 = arith.constant 0 : index
    %c0_21 = arith.constant 0 : index
    %36 = vector.load %arg1[%c1, %c0_20, %c0_21] : memref<2x16x100xf32, #tpu.memory_space<vmem>>, vector<1x16x100xf32>
    %37 = vector.shape_cast %36 : vector<1x16x100xf32> to vector<16x100xf32>
    %cst_22 = arith.constant dense<0.000000e+00> : vector<16x100xf32>
    %38 = tpu.matmul %0, %37, %cst_22 {dimension_numbers = #tpu.dot_dimension_numbers<[1], [0], [0], [1], [0, 0, 1, 1], [], []>} : vector<16x16xf32>, vector<16x100xf32>, vector<16x100xf32> -> vector<16x100xf32>
    %39 = vector.broadcast %1 : vector<16x1xf32> to vector<16x100xf32>
    %40 = arith.addf %38, %39 : vector<16x100xf32>
    %cst_23 = arith.constant 0.00999999977 : f32
    %41 = vector.broadcast %cst_23 : f32 to vector<16x100xf32>
    %42 = arith.mulf %41, %40 : vector<16x100xf32>
    %43 = arith.maximumf %40, %42 : vector<16x100xf32>
    %cst_24 = arith.constant dense<0.000000e+00> : vector<16xf32>
    %44 = vector.multi_reduction <add>, %43, %cst_24 [1] : vector<16x100xf32> to vector<16xf32>
    %45 = vector.shape_cast %44 : vector<16xf32> to vector<16x1xf32>
    %cst_25 = arith.constant 0.00999999977 : f32
    %46 = vector.broadcast %cst_25 : f32 to vector<16x1xf32>
    %47 = arith.mulf %45, %46 : vector<16x1xf32>
    %48 = vector.broadcast %47 : vector<16x1xf32> to vector<16x4xf32>
    %49 = arith.mulf %48, %2 : vector<16x4xf32>
    %cst_26 = arith.constant dense<0.000000e+00> : vector<4xf32>
    %50 = vector.multi_reduction <add>, %49, %cst_26 [0] : vector<16x4xf32> to vector<4xf32>
    %51 = vector.shape_cast %50 : vector<4xf32> to vector<1x4xf32>
    %cst_27 = arith.constant 0.000000e+00 : f32
    %52 = vector.broadcast %cst_27 : f32 to vector<1x4xf32>
    %53 = arith.maximumf %51, %52 : vector<1x4xf32>
    %54 = vector.broadcast %53 : vector<1x4xf32> to vector<16x4xf32>
    %55 = arith.mulf %54, %3 : vector<16x4xf32>
    %cst_28 = arith.constant dense<0.000000e+00> : vector<16xf32>
    %56 = vector.multi_reduction <add>, %55, %cst_28 [1] : vector<16x4xf32> to vector<16xf32>
    %57 = vector.shape_cast %56 : vector<16xf32> to vector<16x1xf32>
    %58 = arith.negf %57 : vector<16x1xf32>
    %59 = math.exp %58 : vector<16x1xf32>
    %cst_29 = arith.constant 1.000000e+00 : f32
    %60 = vector.broadcast %cst_29 : f32 to vector<16x1xf32>
    %61 = arith.addf %60, %59 : vector<16x1xf32>
    %62 = arith.divf %60, %61 : vector<16x1xf32>
    %63 = vector.broadcast %62 : vector<16x1xf32> to vector<16x100xf32>
    %64 = arith.mulf %43, %63 : vector<16x100xf32>
    %c1_30 = arith.constant 1 : index
    %c0_31 = arith.constant 0 : index
    %c0_32 = arith.constant 0 : index
    %65 = vector.load %arg6[%c1_30, %c0_31, %c0_32] : memref<2x16x100xf32, #tpu.memory_space<vmem>>, vector<1x16x100xf32>
    %66 = vector.shape_cast %65 : vector<1x16x100xf32> to vector<16x100xf32>
    %67 = vector.shape_cast %64 : vector<16x100xf32> to vector<1x16x100xf32>
    tpu.vector_store %arg6[%c1_30, %c0_31, %c0_32], %67 {strides = array<i32>} : memref<2x16x100xf32, #tpu.memory_space<vmem>>, vector<1x16x100xf32>,
    return
  }
  func.func @transform_0(%arg0: i32) -> (i32, i32, i32) {
    %c0_i32 = arith.constant 0 : i32
    %c0_i32_0 = arith.constant 0 : i32
    %c0_i32_1 = arith.constant 0 : i32
    return %arg0, %c0_i32, %c0_i32_0 : i32, i32, i32
  }
  func.func @transform_1(%arg0: i32) -> (i32, i32) {
    %c0_i32 = arith.constant 0 : i32
    %c0_i32_0 = arith.constant 0 : i32
    %c0_i32_1 = arith.constant 0 : i32
    return %c0_i32, %c0_i32_0 : i32, i32
  }
  func.func @transform_2(%arg0: i32) -> (i32, i32) {
    %c0_i32 = arith.constant 0 : i32
    %c0_i32_0 = arith.constant 0 : i32
    %c0_i32_1 = arith.constant 0 : i32
    return %c0_i32, %c0_i32_0 : i32, i32
  }
  func.func @transform_3(%arg0: i32) -> (i32, i32) {
    %c0_i32 = arith.constant 0 : i32
    %c0_i32_0 = arith.constant 0 : i32
    %c0_i32_1 = arith.constant 0 : i32
    return %c0_i32, %c0_i32_0 : i32, i32
  }
  func.func @transform_4(%arg0: i32) -> (i32, i32) {
    %c0_i32 = arith.constant 0 : i32
    %c0_i32_0 = arith.constant 0 : i32
    %c0_i32_1 = arith.constant 0 : i32
    return %c0_i32, %c0_i32_0 : i32, i32
  }
  func.func @transform_5(%arg0: i32) -> (i32, i32, i32) {
    %c0_i32 = arith.constant 0 : i32
    %c0_i32_0 = arith.constant 0 : i32
    %c0_i32_1 = arith.constant 0 : i32
    return %arg0, %c0_i32, %c0_i32_0 : i32, i32, i32
  }
}

</mosaic_0001>

<llo_original>
// kernel: tpu_custom_call.1
$region0: #{tpu_custom_call.1}
  #allocation0 [shape = 'u32[]', space=smem, size = 0x4, offset = 0x4, fixed_abs, tag = 'smem constant byte address 0x4 - core index']
  #allocation1 [shape = 'u32[144,128]{1,0:T(1,128)}', space=vmem, size = 0x12000, scoped, tag = 'internal scratch']
  %s0 = inlined_call_operand.vmem [shape: f32[2,16,100], index: 0, kind: input, shape index: {}]
  %s1 = inlined_call_operand.vmem [shape: f32[16,16], index: 1, kind: input, shape index: {}]
  %s2 = inlined_call_operand.vmem [shape: f32[16,1], index: 2, kind: input, shape index: {}]
  %s3 = inlined_call_operand.vmem [shape: f32[16,4], index: 3, kind: input, shape index: {}]
  %s4 = inlined_call_operand.vmem [shape: f32[16,4], index: 4, kind: input, shape index: {}]
  %s5 = inlined_call_operand.hbm [shape: f32[2,16,100], index: 5, kind: output, shape index: {}]
  %s6 = sld [smem:[#allocation0]]
  $region30: #{tpu_custom_call.1} parent=0
    _
  %s8 = ssub.s32 1, %s6
  %s9 = scalar_select 0, %s8, %s6
  $region1: #{tpu_custom_call.1} parent=0
    #allocation2 [shape = 'u8[16384]{0}', space=vmem, size = 0x4000, scoped, tag = 'output window, operand 0, single buffered']
    #allocation3 [shape = 's32[1]{0}', space=sflag, size = 0x4, scoped, tag = 'scoped memory for tpu_custom_call.1']
    %10 = vsyncpa [#allocation3], 0
    // Predicated region
    $region2: #{tpu_custom_call.1} parent=1 // pred_check
      _
    $region3: #{tpu_custom_call.1} parent=1 // pred_check_branch
      %12 = sbr.rel (0) target = $region5
    $region4: #{tpu_custom_call.1} parent=1 // pred_region
      _
    $region5: #{tpu_custom_call.1} parent=1 // pred_fallthru
      _
    // Predicated region
    $region6: #{tpu_custom_call.1} parent=1 // pred_check
      _
    $region7: #{tpu_custom_call.1} parent=1 // pred_check_branch
      %14 = sbr.rel (0) target = $region9
    $region8: #{tpu_custom_call.1} parent=1 // pred_region
      _
    $region9: #{tpu_custom_call.1} parent=1 // pred_fallthru
      _
    // Predicated region
    $region10: #{tpu_custom_call.1} parent=1 // pred_check
      _
    $region11: #{tpu_custom_call.1} parent=1 // pred_check_branch
      %16 = sbr.rel (0) target = $region13
    $region12: #{tpu_custom_call.1} parent=1 // pred_region
      _
    $region13: #{tpu_custom_call.1} parent=1 // pred_fallthru
      _
    // Predicated region
    $region14: #{tpu_custom_call.1} parent=1 // pred_check
      _
    $region15: #{tpu_custom_call.1} parent=1 // pred_check_branch
      %18 = sbr.rel (0) target = $region17
    $region16: #{tpu_custom_call.1} parent=1 // pred_region
      _
    $region17: #{tpu_custom_call.1} parent=1 // pred_fallthru
      _
    // Predicated region
    $region18: #{tpu_custom_call.1} parent=1 // pred_check
      _
    $region19: #{tpu_custom_call.1} parent=1 // pred_check_branch
      %20 = sbr.rel (0) target = $region21
    $region20: #{tpu_custom_call.1} parent=1 // pred_region
      _
    $region21: #{tpu_custom_call.1} parent=1 // pred_fallthru
      _
    %v21 = vld [vmem:[%s1] sm:$0xff]
    %v22 = vld [vmem:[%s1 + $0x8] sm:$0xff]
    %v23 = vld [vmem:[%s2] sm:$0xff]
    %v24 = vld [vmem:[%s2 + $0x8] sm:$0xff]
    %v25 = vld [vmem:[%s3] sm:$0xff]
    %v26 = vld [vmem:[%s3 + $0x8] sm:$0xff]
    %v27 = vld [vmem:[%s4] sm:$0xff]
    %v28 = vld [vmem:[%s4 + $0x8] sm:$0xff]
    %v29 = vld [vmem:[%s0] sm:$0xff]
    %v30 = vld [vmem:[%s0 + $0x8] sm:$0xff]
    %32 = vset.pattern.permute.xlu0 0
    %33 = vperm.xlu0 %32, %v23
    %v34 = vpop.permute.xlu0 %33
    %37 = vset.pattern.permute.xlu0 0
    %38 = vperm.xlu0 %37, %v24
    %v39 = vpop.permute.xlu0 %38
    %vm41 = vcmask 130048
    %v43 = vsel %vm41, %v21, 0
    %v46 = vsel %vm41, %v22, 0
    %48 = vmatprep.subr.mxu0 0.0
    %49 = vmatpush1.msra.mxu0 0.0
    %50 = vmatprep.subr.mxu0 0.0
    %51 = vmatpush1.msra.mxu0 0.0
    %52 = vmatprep.subr.mxu0 0.0
    %53 = vmatpush1.msra.mxu0 0.0
    %54 = vmatprep.subr.mxu0 0.0
    %55 = vmatpush1.msra.mxu0 0.0
    %56 = vmatprep.subr.mxu0 0.0
    %57 = vmatpush1.msra.mxu0 0.0
    %58 = vmatprep.subr.mxu0 0.0
    %59 = vmatpush1.msra.mxu0 0.0
    %60 = vmatprep.subr.mxu0 0.0
    %61 = vmatpush1.msra.mxu0 0.0
    %62 = vmatprep.subr.mxu0 0.0
    %63 = vmatpush1.msra.mxu0 0.0
    %64 = vmatprep.subr.mxu0 0.0
    %65 = vmatpush1.msra.mxu0 0.0
    %66 = vmatprep.subr.mxu0 0.0
    %67 = vmatpush1.msra.mxu0 0.0
    %68 = vmatprep.subr.mxu0 0.0
    %69 = vmatpush1.msra.mxu0 0.0
    %70 = vmatprep.subr.mxu0 0.0
    %71 = vmatpush1.msra.mxu0 0.0
    %72 = vmatprep.subr.mxu0 0.0
    %73 = vmatpush1.msra.mxu0 0.0
    %74 = vmatprep.subr.mxu0 0.0
    %75 = vmatpush1.msra.mxu0 0.0
    %76 = vmatprep.subr.mxu0 0.0
    %77 = vmatpush1.msra.mxu0 %v30
    %78 = vmatprep.subr.mxu0 0.0
    %79 = vmatpush1.msra.mxu0 %v29
    %80 = vmatprep.subr.mxu0 0.0
    %81 = vmatpush2.msra.mxu0 0.0
    %82 = vmatprep.subr.mxu0 0.0
    %83 = vmatpush2.msra.mxu0 0.0
    %84 = vmatprep.subr.mxu0 0.0
    %85 = vmatpush2.msra.mxu0 0.0
    %86 = vmatprep.subr.mxu0 0.0
    %87 = vmatpush2.msra.mxu0 0.0
    %88 = vmatprep.subr.mxu0 0.0
    %89 = vmatpush2.msra.mxu0 0.0
    %90 = vmatprep.subr.mxu0 0.0
    %91 = vmatpush2.msra.mxu0 0.0
    %92 = vmatprep.subr.mxu0 0.0
    %93 = vmatpush2.msra.mxu0 0.0
    %94 = vmatprep.subr.mxu0 0.0
    %95 = vmatpush2.msra.mxu0 0.0
    %96 = vmatprep.subr.mxu0 0.0
    %97 = vmatpush2.msra.mxu0 0.0
    %98 = vmatprep.subr.mxu0 0.0
    %99 = vmatpush2.msra.mxu0 0.0
    %100 = vmatprep.subr.mxu0 0.0
    %101 = vmatpush2.msra.mxu0 0.0
    %102 = vmatprep.subr.mxu0 0.0
    %103 = vmatpush2.msra.mxu0 0.0
    %104 = vmatprep.subr.mxu0 0.0
    %105 = vmatpush2.msra.mxu0 0.0
    %106 = vmatprep.subr.mxu0 0.0
    %107 = vmatpush2.msra.mxu0 0.0
    %108 = vmatprep.subr.mxu0 0.0
    %109 = vmatpush2.msra.mxu0 0.0
    %110 = vmatprep.subr.mxu0 0.0
    %111 = vmatpush2.msra.mxu0 0.0
    %112 = vmatprep.mubr.f32.mxu0 0.0
    %113 = vmatmul.mubr.f32.gmra.mxu0 %v43
    %v114 = vpop.f32.mrf.mxu0
    %v115 = vadd.f32 %v34, %v114
    %v116 = vpop.f32.mrf.mxu0
    %117 = vmatprep.mubr.f32.mxu0 0.0
    %118 = vmatmul.mubr.f32.gmra.mxu0 %v46
    %v119 = vpop.f32.mrf.mxu0
    %v120 = vadd.f32 %v39, %v119
    %v121 = vpop.f32.mrf.mxu0
    %122 = vdwg.mxu0
    %v123 = vmul.f32 %v115, 0.01
    %v124 = vmul.f32 %v120, 0.01
    %v125 = vmax.f32 %v115, %v123
    %v126 = vmax.f32 %v120, %v124
    %vm127 = vcmask 818176
    %v128 = vsel %vm127, %v125, 0.0
    %129 = vadd.xlane.f32.xlu0 %v128
    %v130 = vpop.xlane.xlu0 %129
    %v131 = vsel %vm127, %v126, 0.0
    %132 = vadd.xlane.f32.xlu0 %v131
    %v133 = vpop.xlane.xlu0 %132
    %v134 = vmul.f32 %v130, 0.01
    %v135 = vmul.f32 %v133, 0.01
    %v136 = vmul.f32 %v134, %v25
    %v137 = vmul.f32 %v135, %v26
    %vm138 = vcmask 31744
    %v139 = vsel %vm138, %v136, 0.0
    %v140 = vsel %vm138, %v137, 0.0
    %v141 = vadd.f32 %v139, %v140
    %v142 = vrot.slane %v141, 4
    %v143 = vadd.f32 %v141, %v142
    %v144 = vrot.slane %v143, 2
    %v145 = vadd.f32 %v143, %v144
    %v146 = vrot.slane %v145, 1
    %v147 = vadd.f32 %v145, %v146
    %v148 = vmax.f32 %v147, 0.0
    %v149 = vmul.f32 %v148, %v27
    %v150 = vmul.f32 %v148, %v28
    %v151 = vsel %vm138, %v149, 0.0
    %152 = vadd.xlane.f32.xlu0 %v151
    %v153 = vpop.xlane.xlu0 %152
    %v154 = vsel %vm138, %v150, 0.0
    %155 = vadd.xlane.f32.xlu0 %v154
    %v156 = vpop.xlane.xlu0 %155
    %v157 = vxor.u32 %v153, 2147483648
    %v158 = vxor.u32 %v156, 2147483648
    %v159 = vmul.f32 %v157, 1.442695
    %v160 = vpow.pop %v159
    %v161 = vmul.f32 %v158, 1.442695
    %v162 = vpow.pop %v161
    %v163 = vadd.f32 %v160, 1.0
    %v164 = vadd.f32 %v162, 1.0
    %v165 = vrcp.pop %v163
    %v166 = vmul.f32 1.0, %v165
    %v167 = vrcp.pop %v164
    %v168 = vmul.f32 1.0, %v167
    %v169 = vmul.f32 %v125, %v166
    %v170 = vmul.f32 %v126, %v168
    %171 = vst.msk [vmem:[#allocation2] sm:$0xff] %vm127, %v169
    %172 = vst.msk [vmem:[#allocation2 + $0x8] sm:$0xff] %vm127, %v170
    %s173 = scalar_lea.vmem %s0, 16
    %v174 = vld [vmem:[%s173] sm:$0xff]
    %v175 = vld [vmem:[%s173 + $0x8] sm:$0xff]
    %176 = vmatprep.subr.mxu0 0.0
    %177 = vmatpush1.msra.mxu0 0.0
    %178 = vmatprep.subr.mxu0 0.0
    %179 = vmatpush1.msra.mxu0 0.0
    %180 = vmatprep.subr.mxu0 0.0
    %181 = vmatpush1.msra.mxu0 0.0
    %182 = vmatprep.subr.mxu0 0.0
    %183 = vmatpush1.msra.mxu0 0.0
    %184 = vmatprep.subr.mxu0 0.0
    %185 = vmatpush1.msra.mxu0 0.0
    %186 = vmatprep.subr.mxu0 0.0
    %187 = vmatpush1.msra.mxu0 0.0
    %188 = vmatprep.subr.mxu0 0.0
    %189 = vmatpush1.msra.mxu0 0.0
    %190 = vmatprep.subr.mxu0 0.0
    %191 = vmatpush1.msra.mxu0 0.0
    %192 = vmatprep.subr.mxu0 0.0
    %193 = vmatpush1.msra.mxu0 0.0
    %194 = vmatprep.subr.mxu0 0.0
    %195 = vmatpush1.msra.mxu0 0.0
    %196 = vmatprep.subr.mxu0 0.0
    %197 = vmatpush1.msra.mxu0 0.0
    %198 = vmatprep.subr.mxu0 0.0
    %199 = vmatpush1.msra.mxu0 0.0
    %200 = vmatprep.subr.mxu0 0.0
    %201 = vmatpush1.msra.mxu0 0.0
    %202 = vmatprep.subr.mxu0 0.0
    %203 = vmatpush1.msra.mxu0 0.0
    %204 = vmatprep.subr.mxu0 0.0
    %205 = vmatpush1.msra.mxu0 %v175
    %206 = vmatprep.subr.mxu0 0.0
    %207 = vmatpush1.msra.mxu0 %v174
    %208 = vmatprep.subr.mxu0 0.0
    %209 = vmatpush2.msra.mxu0 0.0
    %210 = vmatprep.subr.mxu0 0.0
    %211 = vmatpush2.msra.mxu0 0.0
    %212 = vmatprep.subr.mxu0 0.0
    %213 = vmatpush2.msra.mxu0 0.0
    %214 = vmatprep.subr.mxu0 0.0
    %215 = vmatpush2.msra.mxu0 0.0
    %216 = vmatprep.subr.mxu0 0.0
    %217 = vmatpush2.msra.mxu0 0.0
    %218 = vmatprep.subr.mxu0 0.0
    %219 = vmatpush2.msra.mxu0 0.0
    %220 = vmatprep.subr.mxu0 0.0
    %221 = vmatpush2.msra.mxu0 0.0
    %222 = vmatprep.subr.mxu0 0.0
    %223 = vmatpush2.msra.mxu0 0.0
    %224 = vmatprep.subr.mxu0 0.0
    %225 = vmatpush2.msra.mxu0 0.0
    %226 = vmatprep.subr.mxu0 0.0
    %227 = vmatpush2.msra.mxu0 0.0
    %228 = vmatprep.subr.mxu0 0.0
    %229 = vmatpush2.msra.mxu0 0.0
    %230 = vmatprep.subr.mxu0 0.0
    %231 = vmatpush2.msra.mxu0 0.0
    %232 = vmatprep.subr.mxu0 0.0
    %233 = vmatpush2.msra.mxu0 0.0
    %234 = vmatprep.subr.mxu0 0.0
    %235 = vmatpush2.msra.mxu0 0.0
    %236 = vmatprep.subr.mxu0 0.0
    %237 = vmatpush2.msra.mxu0 0.0
    %238 = vmatprep.subr.mxu0 0.0
    %239 = vmatpush2.msra.mxu0 0.0
    %240 = vmatprep.mubr.f32.mxu0 0.0
    %241 = vmatmul.mubr.f32.gmra.mxu0 %v43
    %v242 = vpop.f32.mrf.mxu0
    %v243 = vadd.f32 %v34, %v242
    %v244 = vpop.f32.mrf.mxu0
    %245 = vmatprep.mubr.f32.mxu0 0.0
    %246 = vmatmul.mubr.f32.gmra.mxu0 %v46
    %v247 = vpop.f32.mrf.mxu0
    %v248 = vadd.f32 %v39, %v247
    %v249 = vpop.f32.mrf.mxu0
    %250 = vdwg.mxu0
    %v251 = vmul.f32 %v243, 0.01
    %v252 = vmul.f32 %v248, 0.01
    %v253 = vmax.f32 %v243, %v251
    %v254 = vmax.f32 %v248, %v252
    %v255 = vsel %vm127, %v253, 0.0
    %256 = vadd.xlane.f32.xlu0 %v255
    %v257 = vpop.xlane.xlu0 %256
    %v258 = vsel %vm127, %v254, 0.0
    %259 = vadd.xlane.f32.xlu0 %v258
    %v260 = vpop.xlane.xlu0 %259
    %v261 = vmul.f32 %v257, 0.01
    %v262 = vmul.f32 %v260, 0.01
    %v263 = vmul.f32 %v261, %v25
    %v264 = vmul.f32 %v262, %v26
    %v265 = vsel %vm138, %v263, 0.0
    %v266 = vsel %vm138, %v264, 0.0
    %v267 = vadd.f32 %v265, %v266
    %v268 = vrot.slane %v267, 4
    %v269 = vadd.f32 %v267, %v268
    %v270 = vrot.slane %v269, 2
    %v271 = vadd.f32 %v269, %v270
    %v272 = vrot.slane %v271, 1
    %v273 = vadd.f32 %v271, %v272
    %v274 = vmax.f32 %v273, 0.0
    %v275 = vmul.f32 %v274, %v27
    %v276 = vmul.f32 %v274, %v28
    %v277 = vsel %vm138, %v275, 0.0
    %278 = vadd.xlane.f32.xlu0 %v277
    %v279 = vpop.xlane.xlu0 %278
    %v280 = vsel %vm138, %v276, 0.0
    %281 = vadd.xlane.f32.xlu0 %v280
    %v282 = vpop.xlane.xlu0 %281
    %v283 = vxor.u32 %v279, 2147483648
    %v284 = vxor.u32 %v282, 2147483648
    %v285 = vmul.f32 %v283, 1.442695
    %v286 = vpow.pop %v285
    %v287 = vmul.f32 %v284, 1.442695
    %v288 = vpow.pop %v287
    %v289 = vadd.f32 %v286, 1.0
    %v290 = vadd.f32 %v288, 1.0
    %v291 = vrcp.pop %v289
    %v292 = vmul.f32 1.0, %v291
    %v293 = vrcp.pop %v290
    %v294 = vmul.f32 1.0, %v293
    %v295 = vmul.f32 %v253, %v292
    %v296 = vmul.f32 %v254, %v294
    %s297 = scalar_lea.vmem [#allocation2], 16
    %298 = vst.msk [vmem:[%s297] sm:$0xff] %vm127, %v295
    %299 = vst.msk [vmem:[%s297 + $0x8] sm:$0xff] %vm127, %v296
    // Predicated region
    $region22: #{tpu_custom_call.1} parent=1 // pred_check
      _
    $region23: #{tpu_custom_call.1} parent=1 // pred_check_branch
      %301 = sbr.rel (0) target = $region25
    $region24: #{tpu_custom_call.1} parent=1 // pred_region
      %s303 = ssub.s32 512, 512
      %304 = vsyncadd [#allocation3], %s303
      %s305 = sshll.u32 [#allocation2], 4
      %s306 = int_to_ptr.vmem [resolvable:$true] %s305
      %311 = dma.vmem_to_hbm [thread:$0]  %s306, 512, %s5, [#allocation3], 128, 128, 8
    $region25: #{tpu_custom_call.1} parent=1 // pred_fallthru
      _
    // Predicated region
    $region26: #{tpu_custom_call.1} parent=1 // pred_check
      _
    $region27: #{tpu_custom_call.1} parent=1 // pred_check_branch
      %313 = sbr.rel (0) target = $region29
    $region28: #{tpu_custom_call.1} parent=1 // pred_region
      %314 = dma.done [#allocation3], 512
    $region29: #{tpu_custom_call.1} parent=1 // pred_fallthru
      _
    %315 = vsyncpa [#allocation3], 1

</llo_original>
